<compile_context>
chip_gen: v7x
topology: tpu7x:2x2x1
jax: 0.10.0
libtpu: 0.0.40
codegen_flags: <defaults>
</compile_context>

<pallas_src>
import functools

import jax
import jax.numpy as jnp
from jax.experimental import pallas as pl
from jax.experimental.pallas import tpu as pltpu

# MXU feed dtype: bf16 gives 2-4x MXU throughput on v6e/v7x and halves the
# im2col staging traffic.  Flip to jnp.float32 for exact-parity mode
# (elementwise math / accumulation / BN stats are f32 either way).
MXU_FEED_DTYPE = jnp.bfloat16

# Per-tap row slot in the im2col tile, rounded so every staging store starts on
# a native-tile boundary (bf16 packs 16 rows per (16,128) tile; 16 is also a
# multiple of the f32 8-row sublane tile).  The padded K rows carry zero
# weights, so they only add MXU work that is idle anyway at these sizes; at
# production channel counts (>=64) the padding fraction vanishes.
COL_ALIGN = 16


def _round_up(x, m):
    return ((x + m - 1) // m) * m


# ----------------------------------------------------------------------------
# Kernel: fused [previous-stage BN+ReLU] -> 3x3 dilated conv (single im2col
#         matmul over the whole batch) -> per-channel BN partial statistics.
# ----------------------------------------------------------------------------
def _fused_conv_kernel(x_ref, w_ref, scale_ref, shift_ref,      # inputs
                       y_ref, stats_ref,                        # outputs
                       xpad_ref, col_ref,                       # VMEM scratch
                       *, H, W, dilation, PF, c_in_pad, apply_input_act):
    # x_ref:     (NB, C_in, P)         P = H*W, flattened spatial on lanes
    # w_ref:     (C_out, 9*C_in_pad)   im2col weights (tap-major), MXU feed dtype
    # scale_ref: (C_in, 1)             BN scale of the *previous* stage (f32)
    # shift_ref: (C_in, 1)             BN shift of the *previous* stage (f32)
    # y_ref:     (NB, C_out, P)        "same"-size (pad = dilation) conv output
    # stats_ref: (1, C_out, 2)         per-block (sum, sum-of-squares) partials
    # xpad_ref:  (NB*C_in_pad, P+2*PF) zero-haloed flat input, f32 scratch
    # col_ref:   (9*C_in_pad, NB*P)    staged im2col tile (MXU feed dtype)
    nb, c_in, P = x_ref.shape
    d = dilation

    # --- zero ONLY the halo slabs (interior is fully rewritten every step) ---
    zero_halo = jnp.zeros((nb * c_in_pad, PF), jnp.float32)
    xpad_ref[:, 0:PF] = zero_halo
    xpad_ref[:, PF + P:PF + P + PF] = zero_halo

    # --- input path: fused previous-stage BN+ReLU (f32), channel-pad to an
    #     aligned slab, store lane-aligned into the haloed buffer ---
    for b in range(nb):
        xb = x_ref[b].astype(jnp.float32)                        # (C_in, P)
        if apply_input_act:
            xb = jnp.maximum(xb * scale_ref[...] + shift_ref[...], 0.0)
        if c_in_pad != c_in:
            xb = jnp.concatenate(
                [xb, jnp.zeros((c_in_pad - c_in, P), jnp.float32)], axis=0)
        xpad_ref[b * c_in_pad:(b + 1) * c_in_pad, PF:PF + P] = xb

    # --- stage the im2col tile: ONE lane-shifted load per tap covers every
    #     batch element (rows are independent (batch, channel) planes).
    #     Column masks are hoisted (grid-invariant). ---
    col_idx = jax.lax.broadcasted_iota(jnp.int32, (1, P), 1) % W
    for ky in range(3):
        for kx in range(3):
            dy = (ky - 1) * d
            dx = (kx - 1) * d
            off = dy * W + dx
            t = ky * 3 + kx
            s = xpad_ref[:, PF + off:PF + off + P]               # (NB*C_in_pad, P)
            if dx != 0:
                ok = (col_idx + dx >= 0) & (col_idx + dx < W)
                s = jnp.where(ok, s, 0.0)
            s = s.astype(col_ref.dtype)                          # bf16 feed
            for b in range(nb):
                # 16-row / 128-lane aligned, unmasked stores.
                col_ref[t * c_in_pad:(t + 1) * c_in_pad,
                        b * P:(b + 1) * P] = s[b * c_in_pad:(b + 1) * c_in_pad, :]

    # --- one MXU matmul over all taps/channels and all batch columns.
    #     (Conv bias intentionally omitted: training-mode BN cancels it.) ---
    acc = jnp.dot(w_ref[...], col_ref[...],
                  preferred_element_type=jnp.float32)            # (C_out, NB*P) f32

    # --- BatchNorm partial statistics for THIS stage (reduced in the wrapper) --
    h_out = H + 2 - 2 * d
    w_out = W + 2 - 2 * d
    if h_out == H:                                               # dilation == 1
        valid = acc
    else:
        # padding=1 with dilation>1 crops the "same"-size result in the
        # wrapper; mask the statistics to the kept region.
        pos = jax.lax.broadcasted_iota(jnp.int32, (1, nb * P), 1) % P
        r_i = pos // W
        c_i = pos % W
        lo = d - 1
        ok = ((r_i >= lo) & (r_i < lo + h_out) &
              (c_i >= lo) & (c_i < lo + w_out))
        valid = jnp.where(ok, acc, 0.0)
    csum = jnp.sum(valid, axis=1, keepdims=True)                 # (C_out, 1) f32
    csq = jnp.sum(valid * valid, axis=1, keepdims=True)          # (C_out, 1) f32
    # Single stats output per grid step (previously two last-dim-1 outputs).
    stats_ref[0] = jnp.concatenate([csum, csq], axis=1)          # (C_out, 2)

    # --- conv output written per batch as lane-aligned (C_out, P) slabs ---
    for b in range(nb):
        y_ref[b] = acc[:, b * P:(b + 1) * P].astype(y_ref.dtype)


def fused_conv(x_flat, w_mat, in_scale, in_shift, H, W, dilation,
               apply_input_act, batch_block=None):
    """One fused conv stage.

    The whole batch is folded onto the matmul lane axis (columns = NB*H*W), so
    the default grid is (1,).  `batch_block` splits the batch into independent
    "parallel" grid steps (e.g. n//2 on v7x to occupy both TensorCores).
    """
    n, c_in, P = x_flat.shape
    c_out = w_mat.shape[0]
    c_in_pad = _round_up(c_in, COL_ALIGN)
    assert P == H * W and w_mat.shape[1] == 9 * c_in_pad
    nb = n if batch_block is None else batch_block
    assert n % nb == 0
    num_blocks = n // nb
    # Lane-aligned halo (>= dilation*W + dilation) so shifted-tap reads never
    # leave the buffer and the interior store stays lane-aligned.
    PF = _round_up(dilation * W + dilation, 128)

    kernel = functools.partial(
        _fused_conv_kernel, H=H, W=W, dilation=dilation, PF=PF,
        c_in_pad=c_in_pad, apply_input_act=apply_input_act)
    return pl.pallas_call(
        kernel,
        out_shape=(jax.ShapeDtypeStruct((n, c_out, P), x_flat.dtype),
                   jax.ShapeDtypeStruct((num_blocks, c_out, 2), jnp.float32)),
        grid=(num_blocks,),
        in_specs=[
            pl.BlockSpec((nb, c_in, P), lambda i: (i, 0, 0)),
            pl.BlockSpec((c_out, 9 * c_in_pad), lambda i: (0, 0)),
            pl.BlockSpec((c_in, 1), lambda i: (0, 0)),
            pl.BlockSpec((c_in, 1), lambda i: (0, 0)),
        ],
        out_specs=(
            pl.BlockSpec((nb, c_out, P), lambda i: (i, 0, 0)),
            pl.BlockSpec((1, c_out, 2), lambda i: (i, 0, 0)),
        ),
        scratch_shapes=[
            pltpu.VMEM((nb * c_in_pad, P + 2 * PF), jnp.float32),  # haloed input
            pltpu.VMEM((9 * c_in_pad, nb * P), MXU_FEED_DTYPE),    # im2col tile
        ],
        compiler_params=pltpu.CompilerParams(
            dimension_semantics=("parallel",),
            # Well under half of v7x's 64 MiB VMEM so a row-tiled production
            # variant keeps double-buffering headroom; demo usage is < 1 MiB.
            vmem_limit_bytes=32 * 1024 * 1024),
    )(x_flat, w_mat, in_scale, in_shift)


# ----------------------------------------------------------------------------
# conv_block forward: conv1(+stats) -> conv2(fused BN1+ReLU on input, +stats)
#                     -> final BN2+ReLU as plain jnp (fused by XLA).
# ----------------------------------------------------------------------------
def conv_block_forward(x_nchw, params, dilation, eps=1e-5, batch_block=None):
    n, c, h, w = x_nchw.shape
    x = x_nchw.reshape(n, c, h * w)               # free layout change (no transpose)
    in_scale = jnp.ones((c, 1), jnp.float32)      # identity affine for the raw input
    in_shift = jnp.zeros((c, 1), jnp.float32)
    apply_act = False

    for i in (1, 2):
        w_hwio = params[f"w{i}"]
        gamma, beta = params[f"gamma{i}"], params[f"beta{i}"]
        c_in, c_out = w_hwio.shape[2], w_hwio.shape[3]
        c_in_pad = _round_up(c_in, COL_ALIGN)
        # (3,3,C_in,C_out) -> (C_out, 9*C_in_pad); row order (tap, C_in) matches
        # the kernel's im2col staging; padded input channels carry zero weights.
        # The conv bias is dropped on purpose: training-mode BN cancels it.
        w_perm = jnp.transpose(w_hwio, (3, 0, 1, 2))             # (C_out,3,3,C_in)
        if c_in_pad != c_in:
            w_perm = jnp.pad(w_perm, ((0, 0), (0, 0), (0, 0), (0, c_in_pad - c_in)))
        w_mat = w_perm.reshape(c_out, 9 * c_in_pad).astype(MXU_FEED_DTYPE)

        y, stats = fused_conv(x, w_mat, in_scale, in_shift, h, w, dilation,
                              apply_act, batch_block)

        h_out, w_out = h + 2 - 2 * dilation, w + 2 - 2 * dilation
        if dilation > 1:
            # padding=1 with dilation>1 shrinks the output: crop the "same"-size
            # result (the in-kernel stats are already masked to this region).
            lo = dilation - 1
            y = y.reshape(n, c_out, h, w)[:, :, lo:lo + h_out, lo:lo + w_out]
            y = y.reshape(n, c_out, h_out * w_out)

        count = n * h_out * w_out
        s = jnp.sum(stats[:, :, 0], axis=0)
        sq = jnp.sum(stats[:, :, 1], axis=0)
        mean = s / count
        # Biased variance (training-mode BN).  NOTE: E[x^2]-mean^2 can lose
        # precision for large-mean activations; acceptable at these scales.
        var = jnp.maximum(sq / count - mean * mean, 0.0)
        bn_scale = gamma * jax.lax.rsqrt(var + eps)
        bn_shift = beta - mean * bn_scale

        x = y
        in_scale = bn_scale.reshape(c_out, 1)
        in_shift = bn_shift.reshape(c_out, 1)
        apply_act = True
        h, w = h_out, w_out

    # Final BN2 + ReLU: plain jnp (no extra Pallas dispatch / HBM round trip;
    # XLA fuses it into the downstream consumer).
    out = jnp.maximum(x * in_scale.reshape(1, -1, 1) + in_shift.reshape(1, -1, 1), 0.0)
    return out.reshape(n, out.shape[1], h, w)     # free reshape back to NCHW


# ----------------------------------------------------------------------------
# Pure-JAX reference (correctness check only; keeps the conv bias, f32 HIGHEST).
# ----------------------------------------------------------------------------
def reference_forward(x_nchw, params, dilation):
    eps = 1e-5
    x = x_nchw
    for i in (1, 2):
        w, b = params[f"w{i}"], params[f"b{i}"]
        gamma, beta = params[f"gamma{i}"], params[f"beta{i}"]
        y = jax.lax.conv_general_dilated(
            x, w, window_strides=(1, 1), padding=((1, 1), (1, 1)),
            rhs_dilation=(dilation, dilation),
            dimension_numbers=("NCHW", "HWIO", "NCHW"),
            precision=jax.lax.Precision.HIGHEST)
        y = y + b.reshape(1, -1, 1, 1)
        mean = jnp.mean(y, axis=(0, 2, 3), keepdims=True)
        var = jnp.mean((y - mean) ** 2, axis=(0, 2, 3), keepdims=True)
        y = (y - mean) * jax.lax.rsqrt(var + eps)
        y = y * gamma.reshape(1, -1, 1, 1) + beta.reshape(1, -1, 1, 1)
        x = jnp.maximum(y, 0.0)
    return x


if __name__ == "__main__":
    ch_in, ch_out, dilation = 4, 8, 1
    N, H, W = 2, 16, 16

    key = jax.random.PRNGKey(0)
    ks = jax.random.split(key, 9)
    params = {
        "w1": jax.random.normal(ks[0], (3, 3, ch_in, ch_out), jnp.float32) * 0.1,
        "b1": jax.random.normal(ks[1], (ch_out,), jnp.float32) * 0.1,
        "gamma1": 1.0 + 0.1 * jax.random.normal(ks[2], (ch_out,), jnp.float32),
        "beta1": jax.random.normal(ks[3], (ch_out,), jnp.float32) * 0.1,
        "w2": jax.random.normal(ks[4], (3, 3, ch_out, ch_out), jnp.float32) * 0.1,
        "b2": jax.random.normal(ks[5], (ch_out,), jnp.float32) * 0.1,
        "gamma2": 1.0 + 0.1 * jax.random.normal(ks[6], (ch_out,), jnp.float32),
        "beta2": jax.random.normal(ks[7], (ch_out,), jnp.float32) * 0.1,
    }
    x = jax.random.normal(ks[8], (N, ch_in, H, W), jnp.float32)

    out = conv_block_forward(x, params, dilation)
    out = jax.block_until_ready(out)

    ref = reference_forward(x, params, dilation)
    err = float(jnp.max(jnp.abs(out - ref)))
    assert out.shape == ref.shape, (out.shape, ref.shape)
    # bf16 MXU feed introduces ~0.4% relative rounding per conv; the f32
    # reference tolerance reflects that (set MXU_FEED_DTYPE=float32 for 1e-2).
    tol = 5e-2 if MXU_FEED_DTYPE == jnp.bfloat16 else 1e-2
    assert err < tol, f"max abs error {err}"
    print("KERNEL_OK")
</pallas_src>

<mosaic_0001>
module attributes {stable_mosaic.version = 11 : i64} {
  func.func @_fused_conv_kernel(%arg0: i32, %arg1: memref<2x4x256xf32, #tpu.memory_space<vmem>>, %arg2: memref<8x144xbf16, #tpu.memory_space<vmem>>, %arg3: memref<4x1xf32, #tpu.memory_space<vmem>>, %arg4: memref<4x1xf32, #tpu.memory_space<vmem>>, %arg5: memref<2x8x256xf32, #tpu.memory_space<vmem>>, %arg6: memref<1x8x2xf32, #tpu.memory_space<vmem>>, %arg7: memref<32x512xf32, #tpu.memory_space<vmem>>, %arg8: memref<144x512xbf16, #tpu.memory_space<vmem>>) attributes {dimension_semantics = [#tpu.dimension_semantics<parallel>], iteration_bounds = array<i64: 1>, scalar_prefetch = 0 : i64, scratch_operands = 2 : i64, tpu.core_type = #tpu.core_type<tc>, window_params = [{transform_indices = @transform_0, window_bounds = array<i64: 2, 4, 256>}, {pipeline_mode = #tpu.pipeline_mode<synchronous>, transform_indices = @transform_1, window_bounds = array<i64: 8, 144>}, {pipeline_mode = #tpu.pipeline_mode<synchronous>, transform_indices = @transform_2, window_bounds = array<i64: 4, 1>}, {pipeline_mode = #tpu.pipeline_mode<synchronous>, transform_indices = @transform_3, window_bounds = array<i64: 4, 1>}, {transform_indices = @transform_4, window_bounds = array<i64: 2, 8, 256>}, {transform_indices = @transform_5, window_bounds = array<i64: 1, 8, 2>}]} {
    %cst = arith.constant 0.000000e+00 : f32
    %0 = vector.broadcast %cst : f32 to vector<32x128xf32>
    %c0 = arith.constant 0 : index
    %c0_0 = arith.constant 0 : index
    %1 = vector.load %arg7[%c0, %c0_0] : memref<32x512xf32, #tpu.memory_space<vmem>>, vector<32x128xf32>
    tpu.vector_store %arg7[%c0, %c0_0], %0 {strides = array<i32>} : memref<32x512xf32, #tpu.memory_space<vmem>>, vector<32x128xf32>,
    %c0_1 = arith.constant 0 : index
    %c384 = arith.constant 384 : index
    %2 = vector.load %arg7[%c0_1, %c384] : memref<32x512xf32, #tpu.memory_space<vmem>>, vector<32x128xf32>
    tpu.vector_store %arg7[%c0_1, %c384], %0 {strides = array<i32>} : memref<32x512xf32, #tpu.memory_space<vmem>>, vector<32x128xf32>,
    %c0_2 = arith.constant 0 : index
    %c0_3 = arith.constant 0 : index
    %c0_4 = arith.constant 0 : index
    %3 = vector.load %arg1[%c0_2, %c0_3, %c0_4] : memref<2x4x256xf32, #tpu.memory_space<vmem>>, vector<1x4x256xf32>
    %4 = vector.shape_cast %3 : vector<1x4x256xf32> to vector<4x256xf32>
    %cst_5 = arith.constant 0.000000e+00 : f32
    %5 = vector.broadcast %cst_5 : f32 to vector<12x256xf32>
    %6 = tpu.concatenate %4, %5 in 0 : vector<4x256xf32>, vector<12x256xf32> -> vector<16x256xf32>
    %c0_6 = arith.constant 0 : index
    %c128 = arith.constant 128 : index
    %7 = vector.load %arg7[%c0_6, %c128] : memref<32x512xf32, #tpu.memory_space<vmem>>, vector<16x256xf32>
    tpu.vector_store %arg7[%c0_6, %c128], %6 {strides = array<i32>} : memref<32x512xf32, #tpu.memory_space<vmem>>, vector<16x256xf32>,
    %c1 = arith.constant 1 : index
    %c0_7 = arith.constant 0 : index
    %c0_8 = arith.constant 0 : index
    %8 = vector.load %arg1[%c1, %c0_7, %c0_8] : memref<2x4x256xf32, #tpu.memory_space<vmem>>, vector<1x4x256xf32>
    %9 = vector.shape_cast %8 : vector<1x4x256xf32> to vector<4x256xf32>
    %cst_9 = arith.constant 0.000000e+00 : f32
    %10 = vector.broadcast %cst_9 : f32 to vector<12x256xf32>
    %11 = tpu.concatenate %9, %10 in 0 : vector<4x256xf32>, vector<12x256xf32> -> vector<16x256xf32>
    %c16 = arith.constant 16 : index
    %c128_10 = arith.constant 128 : index
    %12 = vector.load %arg7[%c16, %c128_10] : memref<32x512xf32, #tpu.memory_space<vmem>>, vector<16x256xf32>
    tpu.vector_store %arg7[%c16, %c128_10], %11 {strides = array<i32>} : memref<32x512xf32, #tpu.memory_space<vmem>>, vector<16x256xf32>,
    %13 = tpu.iota {dimensions = array<i32: 1>} : vector<1x256xi32>
    %c16_i32 = arith.constant 16 : i32
    %c0_i32 = arith.constant 0 : i32
    %14 = arith.cmpi eq, %c16_i32, %c0_i32 : i32
    %c1_i32 = arith.constant 1 : i32
    %15 = arith.select %14, %c1_i32, %c16_i32 : i32
    %16 = vector.broadcast %15 : i32 to vector<1x256xi32>
    %17 = arith.remsi %13, %16 : vector<1x256xi32>
    %c0_i32_11 = arith.constant 0 : i32
    %18 = vector.broadcast %c0_i32_11 : i32 to vector<1x256xi32>
    %19 = arith.cmpi ne, %17, %18 : vector<1x256xi32>
    %c0_i32_12 = arith.constant 0 : i32
    %20 = vector.broadcast %c0_i32_12 : i32 to vector<1x256xi32>
    %21 = arith.cmpi slt, %17, %20 : vector<1x256xi32>
    %c0_i32_13 = arith.constant 0 : i32
    %22 = arith.cmpi slt, %15, %c0_i32_13 : i32
    %23 = vector.broadcast %22 : i1 to vector<1x256xi1>
    %24 = vector.broadcast %23 : vector<1x256xi1> to vector<1x256xi1>
    %25 = arith.xori %21, %24 : vector<1x256xi1>
    %26 = arith.andi %25, %19 : vector<1x256xi1>
    %27 = vector.broadcast %15 : i32 to vector<1x256xi32>
    %28 = arith.addi %17, %27 : vector<1x256xi32>
    %29 = arith.select %26, %28, %17 : vector<1x256xi1>, vector<1x256xi32>
    %c0_14 = arith.constant 0 : index
    %c111 = arith.constant 111 : index
    %30 = vector.load %arg7[%c0_14, %c111] : memref<32x512xf32, #tpu.memory_space<vmem>>, vector<32x256xf32>
    %c-1_i32 = arith.constant -1 : i32
    %31 = vector.broadcast %c-1_i32 : i32 to vector<1x256xi32>
    %32 = arith.addi %29, %31 : vector<1x256xi32>
    %c0_i32_15 = arith.constant 0 : i32
    %33 = vector.broadcast %c0_i32_15 : i32 to vector<1x256xi32>
    %34 = arith.cmpi sge, %32, %33 : vector<1x256xi32>
    %c-1_i32_16 = arith.constant -1 : i32
    %35 = vector.broadcast %c-1_i32_16 : i32 to vector<1x256xi32>
    %36 = arith.addi %29, %35 : vector<1x256xi32>
    %c16_i32_17 = arith.constant 16 : i32
    %37 = vector.broadcast %c16_i32_17 : i32 to vector<1x256xi32>
    %38 = arith.cmpi slt, %36, %37 : vector<1x256xi32>
    %39 = arith.andi %34, %38 : vector<1x256xi1>
    %cst_18 = arith.constant 0.000000e+00 : f32
    %40 = vector.shape_cast %39 : vector<1x256xi1> to vector<1x256xi1>
    %41 = vector.broadcast %40 : vector<1x256xi1> to vector<32x256xi1>
    %42 = vector.broadcast %cst_18 : f32 to vector<32x256xf32>
    %43 = arith.select %41, %30, %42 : vector<32x256xi1>, vector<32x256xf32>
    %44 = arith.truncf %43 : vector<32x256xf32> to vector<32x256xbf16>
    %45 = vector.extract_strided_slice %44 {offsets = [0, 0], sizes = [16, 256], strides = [1, 1]} : vector<32x256xbf16> to vector<16x256xbf16>
    %c0_19 = arith.constant 0 : index
    %c0_20 = arith.constant 0 : index
    %46 = vector.load %arg8[%c0_19, %c0_20] : memref<144x512xbf16, #tpu.memory_space<vmem>>, vector<16x256xbf16>
    tpu.vector_store %arg8[%c0_19, %c0_20], %45 {strides = array<i32>} : memref<144x512xbf16, #tpu.memory_space<vmem>>, vector<16x256xbf16>,
    %47 = vector.extract_strided_slice %44 {offsets = [16, 0], sizes = [16, 256], strides = [1, 1]} : vector<32x256xbf16> to vector<16x256xbf16>
    %c0_21 = arith.constant 0 : index
    %c256 = arith.constant 256 : index
    %48 = vector.load %arg8[%c0_21, %c256] : memref<144x512xbf16, #tpu.memory_space<vmem>>, vector<16x256xbf16>
    tpu.vector_store %arg8[%c0_21, %c256], %47 {strides = array<i32>} : memref<144x512xbf16, #tpu.memory_space<vmem>>, vector<16x256xbf16>,
    %c0_22 = arith.constant 0 : index
    %c112 = arith.constant 112 : index
    %49 = vector.load %arg7[%c0_22, %c112] : memref<32x512xf32, #tpu.memory_space<vmem>>, vector<32x256xf32>
    %50 = arith.truncf %49 : vector<32x256xf32> to vector<32x256xbf16>
    %51 = vector.extract_strided_slice %50 {offsets = [0, 0], sizes = [16, 256], strides = [1, 1]} : vector<32x256xbf16> to vector<16x256xbf16>
    %c16_23 = arith.constant 16 : index
    %c0_24 = arith.constant 0 : index
    %52 = vector.load %arg8[%c16_23, %c0_24] : memref<144x512xbf16, #tpu.memory_space<vmem>>, vector<16x256xbf16>
    tpu.vector_store %arg8[%c16_23, %c0_24], %51 {strides = array<i32>} : memref<144x512xbf16, #tpu.memory_space<vmem>>, vector<16x256xbf16>,
    %53 = vector.extract_strided_slice %50 {offsets = [16, 0], sizes = [16, 256], strides = [1, 1]} : vector<32x256xbf16> to vector<16x256xbf16>
    %c16_25 = arith.constant 16 : index
    %c256_26 = arith.constant 256 : index
    %54 = vector.load %arg8[%c16_25, %c256_26] : memref<144x512xbf16, #tpu.memory_space<vmem>>, vector<16x256xbf16>
    tpu.vector_store %arg8[%c16_25, %c256_26], %53 {strides = array<i32>} : memref<144x512xbf16, #tpu.memory_space<vmem>>, vector<16x256xbf16>,
    %c0_27 = arith.constant 0 : index
    %c113 = arith.constant 113 : index
    %55 = vector.load %arg7[%c0_27, %c113] : memref<32x512xf32, #tpu.memory_space<vmem>>, vector<32x256xf32>
    %c1_i32_28 = arith.constant 1 : i32
    %56 = vector.broadcast %c1_i32_28 : i32 to vector<1x256xi32>
    %57 = arith.addi %29, %56 : vector<1x256xi32>
    %c0_i32_29 = arith.constant 0 : i32
    %58 = vector.broadcast %c0_i32_29 : i32 to vector<1x256xi32>
    %59 = arith.cmpi sge, %57, %58 : vector<1x256xi32>
    %c1_i32_30 = arith.constant 1 : i32
    %60 = vector.broadcast %c1_i32_30 : i32 to vector<1x256xi32>
    %61 = arith.addi %29, %60 : vector<1x256xi32>
    %c16_i32_31 = arith.constant 16 : i32
    %62 = vector.broadcast %c16_i32_31 : i32 to vector<1x256xi32>
    %63 = arith.cmpi slt, %61, %62 : vector<1x256xi32>
    %64 = arith.andi %59, %63 : vector<1x256xi1>
    %cst_32 = arith.constant 0.000000e+00 : f32
    %65 = vector.shape_cast %64 : vector<1x256xi1> to vector<1x256xi1>
    %66 = vector.broadcast %65 : vector<1x256xi1> to vector<32x256xi1>
    %67 = vector.broadcast %cst_32 : f32 to vector<32x256xf32>
    %68 = arith.select %66, %55, %67 : vector<32x256xi1>, vector<32x256xf32>
    %69 = arith.truncf %68 : vector<32x256xf32> to vector<32x256xbf16>
    %70 = vector.extract_strided_slice %69 {offsets = [0, 0], sizes = [16, 256], strides = [1, 1]} : vector<32x256xbf16> to vector<16x256xbf16>
    %c32 = arith.constant 32 : index
    %c0_33 = arith.constant 0 : index
    %71 = vector.load %arg8[%c32, %c0_33] : memref<144x512xbf16, #tpu.memory_space<vmem>>, vector<16x256xbf16>
    tpu.vector_store %arg8[%c32, %c0_33], %70 {strides = array<i32>} : memref<144x512xbf16, #tpu.memory_space<vmem>>, vector<16x256xbf16>,
    %72 = vector.extract_strided_slice %69 {offsets = [16, 0], sizes = [16, 256], strides = [1, 1]} : vector<32x256xbf16> to vector<16x256xbf16>
    %c32_34 = arith.constant 32 : index
    %c256_35 = arith.constant 256 : index
    %73 = vector.load %arg8[%c32_34, %c256_35] : memref<144x512xbf16, #tpu.memory_space<vmem>>, vector<16x256xbf16>
    tpu.vector_store %arg8[%c32_34, %c256_35], %72 {strides = array<i32>} : memref<144x512xbf16, #tpu.memory_space<vmem>>, vector<16x256xbf16>,
    %c0_36 = arith.constant 0 : index
    %c127 = arith.constant 127 : index
    %74 = vector.load %arg7[%c0_36, %c127] : memref<32x512xf32, #tpu.memory_space<vmem>>, vector<32x256xf32>
    %c-1_i32_37 = arith.constant -1 : i32
    %75 = vector.broadcast %c-1_i32_37 : i32 to vector<1x256xi32>
    %76 = arith.addi %29, %75 : vector<1x256xi32>
    %c0_i32_38 = arith.constant 0 : i32
    %77 = vector.broadcast %c0_i32_38 : i32 to vector<1x256xi32>
    %78 = arith.cmpi sge, %76, %77 : vector<1x256xi32>
    %c-1_i32_39 = arith.constant -1 : i32
    %79 = vector.broadcast %c-1_i32_39 : i32 to vector<1x256xi32>
    %80 = arith.addi %29, %79 : vector<1x256xi32>
    %c16_i32_40 = arith.constant 16 : i32
    %81 = vector.broadcast %c16_i32_40 : i32 to vector<1x256xi32>
    %82 = arith.cmpi slt, %80, %81 : vector<1x256xi32>
    %83 = arith.andi %78, %82 : vector<1x256xi1>
    %cst_41 = arith.constant 0.000000e+00 : f32
    %84 = vector.shape_cast %83 : vector<1x256xi1> to vector<1x256xi1>
    %85 = vector.broadcast %84 : vector<1x256xi1> to vector<32x256xi1>
    %86 = vector.broadcast %cst_41 : f32 to vector<32x256xf32>
    %87 = arith.select %85, %74, %86 : vector<32x256xi1>, vector<32x256xf32>
    %88 = arith.truncf %87 : vector<32x256xf32> to vector<32x256xbf16>
    %89 = vector.extract_strided_slice %88 {offsets = [0, 0], sizes = [16, 256], strides = [1, 1]} : vector<32x256xbf16> to vector<16x256xbf16>
    %c48 = arith.constant 48 : index
    %c0_42 = arith.constant 0 : index
    %90 = vector.load %arg8[%c48, %c0_42] : memref<144x512xbf16, #tpu.memory_space<vmem>>, vector<16x256xbf16>
    tpu.vector_store %arg8[%c48, %c0_42], %89 {strides = array<i32>} : memref<144x512xbf16, #tpu.memory_space<vmem>>, vector<16x256xbf16>,
    %91 = vector.extract_strided_slice %88 {offsets = [16, 0], sizes = [16, 256], strides = [1, 1]} : vector<32x256xbf16> to vector<16x256xbf16>
    %c48_43 = arith.constant 48 : index
    %c256_44 = arith.constant 256 : index
    %92 = vector.load %arg8[%c48_43, %c256_44] : memref<144x512xbf16, #tpu.memory_space<vmem>>, vector<16x256xbf16>
    tpu.vector_store %arg8[%c48_43, %c256_44], %91 {strides = array<i32>} : memref<144x512xbf16, #tpu.memory_space<vmem>>, vector<16x256xbf16>,
    %c0_45 = arith.constant 0 : index
    %c128_46 = arith.constant 128 : index
    %93 = vector.load %arg7[%c0_45, %c128_46] : memref<32x512xf32, #tpu.memory_space<vmem>>, vector<32x256xf32>
    %94 = arith.truncf %93 : vector<32x256xf32> to vector<32x256xbf16>
    %95 = vector.extract_strided_slice %94 {offsets = [0, 0], sizes = [16, 256], strides = [1, 1]} : vector<32x256xbf16> to vector<16x256xbf16>
    %c64 = arith.constant 64 : index
    %c0_47 = arith.constant 0 : index
    %96 = vector.load %arg8[%c64, %c0_47] : memref<144x512xbf16, #tpu.memory_space<vmem>>, vector<16x256xbf16>
    tpu.vector_store %arg8[%c64, %c0_47], %95 {strides = array<i32>} : memref<144x512xbf16, #tpu.memory_space<vmem>>, vector<16x256xbf16>,
    %97 = vector.extract_strided_slice %94 {offsets = [16, 0], sizes = [16, 256], strides = [1, 1]} : vector<32x256xbf16> to vector<16x256xbf16>
    %c64_48 = arith.constant 64 : index
    %c256_49 = arith.constant 256 : index
    %98 = vector.load %arg8[%c64_48, %c256_49] : memref<144x512xbf16, #tpu.memory_space<vmem>>, vector<16x256xbf16>
    tpu.vector_store %arg8[%c64_48, %c256_49], %97 {strides = array<i32>} : memref<144x512xbf16, #tpu.memory_space<vmem>>, vector<16x256xbf16>,
    %c0_50 = arith.constant 0 : index
    %c129 = arith.constant 129 : index
    %99 = vector.load %arg7[%c0_50, %c129] : memref<32x512xf32, #tpu.memory_space<vmem>>, vector<32x256xf32>
    %c1_i32_51 = arith.constant 1 : i32
    %100 = vector.broadcast %c1_i32_51 : i32 to vector<1x256xi32>
    %101 = arith.addi %29, %100 : vector<1x256xi32>
    %c0_i32_52 = arith.constant 0 : i32
    %102 = vector.broadcast %c0_i32_52 : i32 to vector<1x256xi32>
    %103 = arith.cmpi sge, %101, %102 : vector<1x256xi32>
    %c1_i32_53 = arith.constant 1 : i32
    %104 = vector.broadcast %c1_i32_53 : i32 to vector<1x256xi32>
    %105 = arith.addi %29, %104 : vector<1x256xi32>
    %c16_i32_54 = arith.constant 16 : i32
    %106 = vector.broadcast %c16_i32_54 : i32 to vector<1x256xi32>
    %107 = arith.cmpi slt, %105, %106 : vector<1x256xi32>
    %108 = arith.andi %103, %107 : vector<1x256xi1>
    %cst_55 = arith.constant 0.000000e+00 : f32
    %109 = vector.shape_cast %108 : vector<1x256xi1> to vector<1x256xi1>
    %110 = vector.broadcast %109 : vector<1x256xi1> to vector<32x256xi1>
    %111 = vector.broadcast %cst_55 : f32 to vector<32x256xf32>
    %112 = arith.select %110, %99, %111 : vector<32x256xi1>, vector<32x256xf32>
    %113 = arith.truncf %112 : vector<32x256xf32> to vector<32x256xbf16>
    %114 = vector.extract_strided_slice %113 {offsets = [0, 0], sizes = [16, 256], strides = [1, 1]} : vector<32x256xbf16> to vector<16x256xbf16>
    %c80 = arith.constant 80 : index
    %c0_56 = arith.constant 0 : index
    %115 = vector.load %arg8[%c80, %c0_56] : memref<144x512xbf16, #tpu.memory_space<vmem>>, vector<16x256xbf16>
    tpu.vector_store %arg8[%c80, %c0_56], %114 {strides = array<i32>} : memref<144x512xbf16, #tpu.memory_space<vmem>>, vector<16x256xbf16>,
    %116 = vector.extract_strided_slice %113 {offsets = [16, 0], sizes = [16, 256], strides = [1, 1]} : vector<32x256xbf16> to vector<16x256xbf16>
    %c80_57 = arith.constant 80 : index
    %c256_58 = arith.constant 256 : index
    %117 = vector.load %arg8[%c80_57, %c256_58] : memref<144x512xbf16, #tpu.memory_space<vmem>>, vector<16x256xbf16>
    tpu.vector_store %arg8[%c80_57, %c256_58], %116 {strides = array<i32>} : memref<144x512xbf16, #tpu.memory_space<vmem>>, vector<16x256xbf16>,
    %c0_59 = arith.constant 0 : index
    %c143 = arith.constant 143 : index
    %118 = vector.load %arg7[%c0_59, %c143] : memref<32x512xf32, #tpu.memory_space<vmem>>, vector<32x256xf32>
    %c-1_i32_60 = arith.constant -1 : i32
    %119 = vector.broadcast %c-1_i32_60 : i32 to vector<1x256xi32>
    %120 = arith.addi %29, %119 : vector<1x256xi32>
    %c0_i32_61 = arith.constant 0 : i32
    %121 = vector.broadcast %c0_i32_61 : i32 to vector<1x256xi32>
    %122 = arith.cmpi sge, %120, %121 : vector<1x256xi32>
    %c-1_i32_62 = arith.constant -1 : i32
    %123 = vector.broadcast %c-1_i32_62 : i32 to vector<1x256xi32>
    %124 = arith.addi %29, %123 : vector<1x256xi32>
    %c16_i32_63 = arith.constant 16 : i32
    %125 = vector.broadcast %c16_i32_63 : i32 to vector<1x256xi32>
    %126 = arith.cmpi slt, %124, %125 : vector<1x256xi32>
    %127 = arith.andi %122, %126 : vector<1x256xi1>
    %cst_64 = arith.constant 0.000000e+00 : f32
    %128 = vector.shape_cast %127 : vector<1x256xi1> to vector<1x256xi1>
    %129 = vector.broadcast %128 : vector<1x256xi1> to vector<32x256xi1>
    %130 = vector.broadcast %cst_64 : f32 to vector<32x256xf32>
    %131 = arith.select %129, %118, %130 : vector<32x256xi1>, vector<32x256xf32>
    %132 = arith.truncf %131 : vector<32x256xf32> to vector<32x256xbf16>
    %133 = vector.extract_strided_slice %132 {offsets = [0, 0], sizes = [16, 256], strides = [1, 1]} : vector<32x256xbf16> to vector<16x256xbf16>
    %c96 = arith.constant 96 : index
    %c0_65 = arith.constant 0 : index
    %134 = vector.load %arg8[%c96, %c0_65] : memref<144x512xbf16, #tpu.memory_space<vmem>>, vector<16x256xbf16>
    tpu.vector_store %arg8[%c96, %c0_65], %133 {strides = array<i32>} : memref<144x512xbf16, #tpu.memory_space<vmem>>, vector<16x256xbf16>,
    %135 = vector.extract_strided_slice %132 {offsets = [16, 0], sizes = [16, 256], strides = [1, 1]} : vector<32x256xbf16> to vector<16x256xbf16>
    %c96_66 = arith.constant 96 : index
    %c256_67 = arith.constant 256 : index
    %136 = vector.load %arg8[%c96_66, %c256_67] : memref<144x512xbf16, #tpu.memory_space<vmem>>, vector<16x256xbf16>
    tpu.vector_store %arg8[%c96_66, %c256_67], %135 {strides = array<i32>} : memref<144x512xbf16, #tpu.memory_space<vmem>>, vector<16x256xbf16>,
    %c0_68 = arith.constant 0 : index
    %c144 = arith.constant 144 : index
    %137 = vector.load %arg7[%c0_68, %c144] : memref<32x512xf32, #tpu.memory_space<vmem>>, vector<32x256xf32>
    %138 = arith.truncf %137 : vector<32x256xf32> to vector<32x256xbf16>
    %139 = vector.extract_strided_slice %138 {offsets = [0, 0], sizes = [16, 256], strides = [1, 1]} : vector<32x256xbf16> to vector<16x256xbf16>
    %c112_69 = arith.constant 112 : index
    %c0_70 = arith.constant 0 : index
    %140 = vector.load %arg8[%c112_69, %c0_70] : memref<144x512xbf16, #tpu.memory_space<vmem>>, vector<16x256xbf16>
    tpu.vector_store %arg8[%c112_69, %c0_70], %139 {strides = array<i32>} : memref<144x512xbf16, #tpu.memory_space<vmem>>, vector<16x256xbf16>,
    %141 = vector.extract_strided_slice %138 {offsets = [16, 0], sizes = [16, 256], strides = [1, 1]} : vector<32x256xbf16> to vector<16x256xbf16>
    %c112_71 = arith.constant 112 : index
    %c256_72 = arith.constant 256 : index
    %142 = vector.load %arg8[%c112_71, %c256_72] : memref<144x512xbf16, #tpu.memory_space<vmem>>, vector<16x256xbf16>
    tpu.vector_store %arg8[%c112_71, %c256_72], %141 {strides = array<i32>} : memref<144x512xbf16, #tpu.memory_space<vmem>>, vector<16x256xbf16>,
    %c0_73 = arith.constant 0 : index
    %c145 = arith.constant 145 : index
    %143 = vector.load %arg7[%c0_73, %c145] : memref<32x512xf32, #tpu.memory_space<vmem>>, vector<32x256xf32>
    %c1_i32_74 = arith.constant 1 : i32
    %144 = vector.broadcast %c1_i32_74 : i32 to vector<1x256xi32>
    %145 = arith.addi %29, %144 : vector<1x256xi32>
    %c0_i32_75 = arith.constant 0 : i32
    %146 = vector.broadcast %c0_i32_75 : i32 to vector<1x256xi32>
    %147 = arith.cmpi sge, %145, %146 : vector<1x256xi32>
    %c1_i32_76 = arith.constant 1 : i32
    %148 = vector.broadcast %c1_i32_76 : i32 to vector<1x256xi32>
    %149 = arith.addi %29, %148 : vector<1x256xi32>
    %c16_i32_77 = arith.constant 16 : i32
    %150 = vector.broadcast %c16_i32_77 : i32 to vector<1x256xi32>
    %151 = arith.cmpi slt, %149, %150 : vector<1x256xi32>
    %152 = arith.andi %147, %151 : vector<1x256xi1>
    %cst_78 = arith.constant 0.000000e+00 : f32
    %153 = vector.shape_cast %152 : vector<1x256xi1> to vector<1x256xi1>
    %154 = vector.broadcast %153 : vector<1x256xi1> to vector<32x256xi1>
    %155 = vector.broadcast %cst_78 : f32 to vector<32x256xf32>
    %156 = arith.select %154, %143, %155 : vector<32x256xi1>, vector<32x256xf32>
    %157 = arith.truncf %156 : vector<32x256xf32> to vector<32x256xbf16>
    %158 = vector.extract_strided_slice %157 {offsets = [0, 0], sizes = [16, 256], strides = [1, 1]} : vector<32x256xbf16> to vector<16x256xbf16>
    %c128_79 = arith.constant 128 : index
    %c0_80 = arith.constant 0 : index
    %159 = vector.load %arg8[%c128_79, %c0_80] : memref<144x512xbf16, #tpu.memory_space<vmem>>, vector<16x256xbf16>
    tpu.vector_store %arg8[%c128_79, %c0_80], %158 {strides = array<i32>} : memref<144x512xbf16, #tpu.memory_space<vmem>>, vector<16x256xbf16>,
    %160 = vector.extract_strided_slice %157 {offsets = [16, 0], sizes = [16, 256], strides = [1, 1]} : vector<32x256xbf16> to vector<16x256xbf16>
    %c128_81 = arith.constant 128 : index
    %c256_82 = arith.constant 256 : index
    %161 = vector.load %arg8[%c128_81, %c256_82] : memref<144x512xbf16, #tpu.memory_space<vmem>>, vector<16x256xbf16>
    tpu.vector_store %arg8[%c128_81, %c256_82], %160 {strides = array<i32>} : memref<144x512xbf16, #tpu.memory_space<vmem>>, vector<16x256xbf16>,
    %c0_83 = arith.constant 0 : index
    %c0_84 = arith.constant 0 : index
    %162 = vector.load %arg2[%c0_83, %c0_84] : memref<8x144xbf16, #tpu.memory_space<vmem>>, vector<8x144xbf16>
    %c0_85 = arith.constant 0 : index
    %c0_86 = arith.constant 0 : index
    %163 = vector.load %arg8[%c0_85, %c0_86] : memref<144x512xbf16, #tpu.memory_space<vmem>>, vector<144x512xbf16>
    %cst_87 = arith.constant dense<0.000000e+00> : vector<8x512xf32>
    %164 = tpu.matmul %162, %163, %cst_87 {dimension_numbers = #tpu.dot_dimension_numbers<[1], [0], [0], [1], [0, 0, 1, 1], [], []>} : vector<8x144xbf16>, vector<144x512xbf16>, vector<8x512xf32> -> vector<8x512xf32>
    %cst_88 = arith.constant dense<0.000000e+00> : vector<8xf32>
    %165 = vector.multi_reduction <add>, %164, %cst_88 [1] : vector<8x512xf32> to vector<8xf32>
    %166 = vector.shape_cast %165 : vector<8xf32> to vector<8x1xf32>
    %167 = arith.mulf %164, %164 : vector<8x512xf32>
    %cst_89 = arith.constant dense<0.000000e+00> : vector<8xf32>
    %168 = vector.multi_reduction <add>, %167, %cst_89 [1] : vector<8x512xf32> to vector<8xf32>
    %169 = vector.shape_cast %168 : vector<8xf32> to vector<8x1xf32>
    %170 = tpu.concatenate %166, %169 in 1 : vector<8x1xf32>, vector<8x1xf32> -> vector<8x2xf32>
    %c0_90 = arith.constant 0 : index
    %c0_91 = arith.constant 0 : index
    %c0_92 = arith.constant 0 : index
    %171 = vector.load %arg6[%c0_90, %c0_91, %c0_92] : memref<1x8x2xf32, #tpu.memory_space<vmem>>, vector<1x8x2xf32>
    %172 = vector.shape_cast %171 : vector<1x8x2xf32> to vector<8x2xf32>
    %173 = vector.shape_cast %170 : vector<8x2xf32> to vector<1x8x2xf32>
    tpu.vector_store %arg6[%c0_90, %c0_91, %c0_92], %173 {strides = array<i32>} : memref<1x8x2xf32, #tpu.memory_space<vmem>>, vector<1x8x2xf32>,
    %174 = vector.extract_strided_slice %164 {offsets = [0, 0], sizes = [8, 256], strides = [1, 1]} : vector<8x512xf32> to vector<8x256xf32>
    %c0_93 = arith.constant 0 : index
    %c0_94 = arith.constant 0 : index
    %c0_95 = arith.constant 0 : index
    %175 = vector.load %arg5[%c0_93, %c0_94, %c0_95] : memref<2x8x256xf32, #tpu.memory_space<vmem>>, vector<1x8x256xf32>
    %176 = vector.shape_cast %175 : vector<1x8x256xf32> to vector<8x256xf32>
    %177 = vector.shape_cast %174 : vector<8x256xf32> to vector<1x8x256xf32>
    tpu.vector_store %arg5[%c0_93, %c0_94, %c0_95], %177 {strides = array<i32>} : memref<2x8x256xf32, #tpu.memory_space<vmem>>, vector<1x8x256xf32>,
    %178 = vector.extract_strided_slice %164 {offsets = [0, 256], sizes = [8, 256], strides = [1, 1]} : vector<8x512xf32> to vector<8x256xf32>
    %c1_96 = arith.constant 1 : index
    %c0_97 = arith.constant 0 : index
    %c0_98 = arith.constant 0 : index
    %179 = vector.load %arg5[%c1_96, %c0_97, %c0_98] : memref<2x8x256xf32, #tpu.memory_space<vmem>>, vector<1x8x256xf32>
    %180 = vector.shape_cast %179 : vector<1x8x256xf32> to vector<8x256xf32>
    %181 = vector.shape_cast %178 : vector<8x256xf32> to vector<1x8x256xf32>
    tpu.vector_store %arg5[%c1_96, %c0_97, %c0_98], %181 {strides = array<i32>} : memref<2x8x256xf32, #tpu.memory_space<vmem>>, vector<1x8x256xf32>,
    return
  }
  func.func @transform_0(%arg0: i32) -> (i32, i32, i32) {
    %c0_i32 = arith.constant 0 : i32
    %c0_i32_0 = arith.constant 0 : i32
    %c0_i32_1 = arith.constant 0 : i32
    return %arg0, %c0_i32, %c0_i32_0 : i32, i32, i32
  }
  func.func @transform_1(%arg0: i32) -> (i32, i32) {
    %c0_i32 = arith.constant 0 : i32
    %c0_i32_0 = arith.constant 0 : i32
    %c0_i32_1 = arith.constant 0 : i32
    return %c0_i32, %c0_i32_0 : i32, i32
  }
  func.func @transform_2(%arg0: i32) -> (i32, i32) {
    %c0_i32 = arith.constant 0 : i32
    %c0_i32_0 = arith.constant 0 : i32
    %c0_i32_1 = arith.constant 0 : i32
    return %c0_i32, %c0_i32_0 : i32, i32
  }
  func.func @transform_3(%arg0: i32) -> (i32, i32) {
    %c0_i32 = arith.constant 0 : i32
    %c0_i32_0 = arith.constant 0 : i32
    %c0_i32_1 = arith.constant 0 : i32
    return %c0_i32, %c0_i32_0 : i32, i32
  }
  func.func @transform_4(%arg0: i32) -> (i32, i32, i32) {
    %c0_i32 = arith.constant 0 : i32
    %c0_i32_0 = arith.constant 0 : i32
    %c0_i32_1 = arith.constant 0 : i32
    return %arg0, %c0_i32, %c0_i32_0 : i32, i32, i32
  }
  func.func @transform_5(%arg0: i32) -> (i32, i32, i32) {
    %c0_i32 = arith.constant 0 : i32
    %c0_i32_0 = arith.constant 0 : i32
    %c0_i32_1 = arith.constant 0 : i32
    return %arg0, %c0_i32, %c0_i32_0 : i32, i32, i32
  }
}

</mosaic_0001>

<llo_original>
// kernel: tpu_custom_call.1
$region0: #{tpu_custom_call.1}
  #allocation0 [shape = 'u32[]', space=smem, size = 0x4, offset = 0x4, fixed_abs, tag = 'smem constant byte address 0x4 - core index']
  #allocation1 [shape = 'u32[144,128]{1,0:T(1,128)}', space=vmem, size = 0x12000, scoped, tag = 'internal scratch']
  #allocation2 [shape = 'f32[32,512]{1,0:T(8,128)}', space=vmem, size = 0x10000, scoped, tag = 'scratch operand']
  #allocation3 [shape = 'bf16[144,512]{1,0:T(16,128)(2,1)}', space=vmem, size = 0x24000, scoped, tag = 'scratch operand']
  %s0 = inlined_call_operand.hbm [shape: f32[2,4,256], index: 0, kind: input, shape index: {}]
  %s1 = inlined_call_operand.vmem [shape: bf16[8,144], index: 1, kind: input, shape index: {}]
  %s2 = inlined_call_operand.vmem [shape: f32[4,1], index: 2, kind: input, shape index: {}]
  %s3 = inlined_call_operand.vmem [shape: f32[4,1], index: 3, kind: input, shape index: {}]
  %s4 = inlined_call_operand.hbm [shape: f32[2,8,256], index: 4, kind: output, shape index: {0}]
  %s5 = inlined_call_operand.vmem [shape: f32[1,8,2], index: 5, kind: output, shape index: {1}]
  %6 = xla_tuple %s4, %s5
  %s7 = sld [smem:[#allocation0]]
  $region38: #{tpu_custom_call.1} parent=0
    _
  %s9 = ssub.s32 1, %s7
  %s10 = scalar_select 0, %s9, %s7
  $region1: #{tpu_custom_call.1} parent=0
    #allocation4 [shape = 'u8[8192]{0}', space=vmem, size = 0x2000, scoped, tag = 'input window, operand 0, single buffered']
    #allocation5 [shape = 's32[1]{0}', space=sflag, size = 0x4, scoped, tag = 'scoped memory for tpu_custom_call.1']
    #allocation6 [shape = 's32[1]{0}', space=sflag, size = 0x4, scoped, tag = 'scoped memory for tpu_custom_call.1']
    #allocation7 [shape = 'u8[16384]{0}', space=vmem, size = 0x4000, scoped, tag = 'output window, operand 0, single buffered']
    %11 = vsyncpa [#allocation5], 0
    %12 = vsyncpa [#allocation6], 0
    // Predicated region
    $region2: #{tpu_custom_call.1} parent=1 // pred_check
      _
    $region3: #{tpu_custom_call.1} parent=1 // pred_check_branch
      %14 = sbr.rel (0) target = $region5
    $region4: #{tpu_custom_call.1} parent=1 // pred_region
      %s16 = ssub.s32 256, 256
      %17 = vsyncadd [#allocation5], %s16
      %s18 = sshll.u32 [#allocation4], 4
      %s19 = int_to_ptr.vmem [resolvable:$true] %s18
      %24 = dma.hbm_to_vmem [thread:$0]  %s0, 256, %s19, [#allocation5], 128, 128, 8
    $region5: #{tpu_custom_call.1} parent=1 // pred_fallthru
      _
    // Predicated region
    $region6: #{tpu_custom_call.1} parent=1 // pred_check
      _
    $region7: #{tpu_custom_call.1} parent=1 // pred_check_branch
      %26 = sbr.rel (0) target = $region9
    $region8: #{tpu_custom_call.1} parent=1 // pred_region
      _
    $region9: #{tpu_custom_call.1} parent=1 // pred_fallthru
      _
    // Predicated region
    $region10: #{tpu_custom_call.1} parent=1 // pred_check
      _
    $region11: #{tpu_custom_call.1} parent=1 // pred_check_branch
      %28 = sbr.rel (0) target = $region13
    $region12: #{tpu_custom_call.1} parent=1 // pred_region
      _
    $region13: #{tpu_custom_call.1} parent=1 // pred_fallthru
      _
    // Predicated region
    $region14: #{tpu_custom_call.1} parent=1 // pred_check
      _
    $region15: #{tpu_custom_call.1} parent=1 // pred_check_branch
      %30 = sbr.rel (0) target = $region17
    $region16: #{tpu_custom_call.1} parent=1 // pred_region
      _
    $region17: #{tpu_custom_call.1} parent=1 // pred_fallthru
      _
    // Predicated region
    $region18: #{tpu_custom_call.1} parent=1 // pred_check
      _
    $region19: #{tpu_custom_call.1} parent=1 // pred_check_branch
      %32 = sbr.rel (0) target = $region21
    $region20: #{tpu_custom_call.1} parent=1 // pred_region
      %33 = dma.done [#allocation5], 256
    $region21: #{tpu_custom_call.1} parent=1 // pred_fallthru
      _
    %35 = vst [vmem:[#allocation2] sm:$0xff] 0.0
    %36 = vst [vmem:[#allocation2 + $0x20] sm:$0xff] 0.0
    %37 = vst [vmem:[#allocation2 + $0x40] sm:$0xff] 0.0
    %38 = vst [vmem:[#allocation2 + $0x60] sm:$0xff] 0.0
    %39 = vst [vmem:[#allocation2 + $0x18] sm:$0xff] 0.0
    %40 = vst [vmem:[#allocation2 + $0x38] sm:$0xff] 0.0
    %41 = vst [vmem:[#allocation2 + $0x58] sm:$0xff] 0.0
    %42 = vst [vmem:[#allocation2 + $0x78] sm:$0xff] 0.0
    %v43 = vld [vmem:[#allocation4] sm:$0xff]
    %v45 = vcombine.high %v43, %v43
    %vm47 = vcmask 1043456
    %v48 = vsel %vm47, %v43, 0.0
    %v49 = vsel %vm47, %v45, 0.0
    %50 = vst [vmem:[#allocation2 + $0x8] sm:$0xff] %v48
    %51 = vst [vmem:[#allocation2 + $0x10] sm:$0xff] %v49
    %52 = vst [vmem:[#allocation2 + $0x28] sm:$0xff] 0.0
    %53 = vst [vmem:[#allocation2 + $0x30] sm:$0xff] 0.0
    %s54 = scalar_lea.vmem [#allocation4], 8
    %v55 = vld [vmem:[%s54] sm:$0xff]
    %v57 = vcombine.high %v55, %v55
    %v59 = vsel %vm47, %v55, 0.0
    %v60 = vsel %vm47, %v57, 0.0
    %61 = vst [vmem:[#allocation2 + $0x48] sm:$0xff] %v59
    %62 = vst [vmem:[#allocation2 + $0x50] sm:$0xff] %v60
    %63 = vst [vmem:[#allocation2 + $0x68] sm:$0xff] 0.0
    %64 = vst [vmem:[#allocation2 + $0x70] sm:$0xff] 0.0
    %v65 = vlaneseq
    %v66 = vand.u32 %v65, 127
    %v67 = vadd.s32 %v66, 128
    %vm68 = vcmp.lt.s32.totalorder %v66, 0
    %v69 = vsub.s32 0, %v66
    %v70 = vsel %vm68, %v69, %v66
    %v71 = vshrl.u32 %v70, 4
    %v72 = vand.u32 %v70, 15
    %v73 = vsub.s32 0, %v72
    %v74 = vsel %vm68, %v73, %v72
    %vm75 = vcmp.lt.s32.totalorder %v67, 0
    %v76 = vsub.s32 0, %v67
    %v77 = vsel %vm75, %v76, %v67
    %v78 = vshrl.u32 %v77, 4
    %v79 = vand.u32 %v77, 15
    %v80 = vsub.s32 0, %v79
    %v81 = vsel %vm75, %v80, %v79
    %vm82 = vcmp.ne.s32.totalorder %v74, 0
    %vm83 = vcmp.ne.s32.totalorder %v81, 0
    %vm84 = vcmp.lt.s32.totalorder %v74, 0
    %vm85 = vcmp.lt.s32.totalorder %v81, 0
    %vm86 = vmand %vm84, %vm82
    %vm87 = vmand %vm85, %vm83
    %v88 = vadd.s32 %v74, 16
    %v89 = vadd.s32 %v81, 16
    %v90 = vsel %vm86, %v88, %v74
    %v91 = vsel %vm87, %v89, %v81
    %v92 = vld [vmem:[#allocation2] sm:$0xff]
    %v93 = vld [vmem:[#allocation2 + $0x8] sm:$0xff]
    %v94 = vld [vmem:[#allocation2 + $0x10] sm:$0xff]
    %v95 = vld [vmem:[#allocation2 + $0x20] sm:$0xff]
    %v96 = vld [vmem:[#allocation2 + $0x28] sm:$0xff]
    %v97 = vld [vmem:[#allocation2 + $0x30] sm:$0xff]
    %v98 = vld [vmem:[#allocation2 + $0x40] sm:$0xff]
    %v99 = vld [vmem:[#allocation2 + $0x48] sm:$0xff]
    %v100 = vld [vmem:[#allocation2 + $0x50] sm:$0xff]
    %v101 = vld [vmem:[#allocation2 + $0x60] sm:$0xff]
    %v102 = vld [vmem:[#allocation2 + $0x68] sm:$0xff]
    %v103 = vld [vmem:[#allocation2 + $0x70] sm:$0xff]
    %v104 = vadd.s32 %v90, 4294967295
    %v105 = vadd.s32 %v91, 4294967295
    %vm106 = vcmp.ge.s32.totalorder %v104, 0
    %vm107 = vcmp.ge.s32.totalorder %v105, 0
    %vm108 = vcmp.lt.s32.totalorder %v104, 16
    %vm109 = vcmp.lt.s32.totalorder %v105, 16
    %vm110 = vmand %vm106, %vm108
    %vm111 = vmand %vm107, %vm109
    %v112 = vsel %vm110, 1, 0
    %v113 = vsel %vm111, 1, 0
    %vm114 = vcmp.eq.s32.totalorder %v112, 1
    %vm115 = vcmp.eq.s32.totalorder %v113, 1
    %128 = vrot.lane.b32.xlu0 %v92, 17
    %v129 = vpop.permute.xlu0 %128
    %130 = vrot.lane.b32.xlu0 %v93, 17
    %v131 = vpop.permute.xlu0 %130
    %132 = vrot.lane.b32.xlu0 %v94, 17
    %v133 = vpop.permute.xlu0 %132
    %134 = vrot.lane.b32.xlu0 %v95, 17
    %v135 = vpop.permute.xlu0 %134
    %136 = vrot.lane.b32.xlu0 %v96, 17
    %v137 = vpop.permute.xlu0 %136
    %138 = vrot.lane.b32.xlu0 %v97, 17
    %v139 = vpop.permute.xlu0 %138
    %140 = vrot.lane.b32.xlu0 %v98, 17
    %v141 = vpop.permute.xlu0 %140
    %142 = vrot.lane.b32.xlu0 %v99, 17
    %v143 = vpop.permute.xlu0 %142
    %144 = vrot.lane.b32.xlu0 %v100, 17
    %v145 = vpop.permute.xlu0 %144
    %146 = vrot.lane.b32.xlu0 %v101, 17
    %v147 = vpop.permute.xlu0 %146
    %148 = vrot.lane.b32.xlu0 %v102, 17
    %v149 = vpop.permute.xlu0 %148
    %150 = vrot.lane.b32.xlu0 %v103, 17
    %v151 = vpop.permute.xlu0 %150
    %vm152 = vcmask 138240
    %v153 = vsel %vm152, %v129, %v131
    %v154 = vsel %vm152, %v131, %v133
    %v155 = vsel %vm152, %v135, %v137
    %v156 = vsel %vm152, %v137, %v139
    %v157 = vsel %vm152, %v141, %v143
    %v158 = vsel %vm152, %v143, %v145
    %v159 = vsel %vm152, %v147, %v149
    %v160 = vsel %vm152, %v149, %v151
    %v169 = vsel %vm114, %v153, 0.0
    %v170 = vsel %vm115, %v154, 0.0
    %v171 = vsel %vm114, %v155, 0.0
    %v172 = vsel %vm115, %v156, 0.0
    %v173 = vsel %vm114, %v157, 0.0
    %v174 = vsel %vm115, %v158, 0.0
    %v175 = vsel %vm114, %v159, 0.0
    %v176 = vsel %vm115, %v160, 0.0
    %v177 = vpack.c.bf16 %v171, %v169
    %v178 = vpack.c.bf16 %v172, %v170
    %v179 = vpack.c.bf16 %v175, %v173
    %v180 = vpack.c.bf16 %v176, %v174
    %181 = vst [vmem:[#allocation3] sm:$0xff] %v177
    %182 = vst [vmem:[#allocation3 + $0x8] sm:$0xff] %v178
    %183 = vst [vmem:[#allocation3 + $0x10] sm:$0xff] %v179
    %184 = vst [vmem:[#allocation3 + $0x18] sm:$0xff] %v180
    %v185 = vld [vmem:[#allocation2] sm:$0xff]
    %v186 = vld [vmem:[#allocation2 + $0x8] sm:$0xff]
    %v187 = vld [vmem:[#allocation2 + $0x10] sm:$0xff]
    %v188 = vld [vmem:[#allocation2 + $0x20] sm:$0xff]
    %v189 = vld [vmem:[#allocation2 + $0x28] sm:$0xff]
    %v190 = vld [vmem:[#allocation2 + $0x30] sm:$0xff]
    %v191 = vld [vmem:[#allocation2 + $0x40] sm:$0xff]
    %v192 = vld [vmem:[#allocation2 + $0x48] sm:$0xff]
    %v193 = vld [vmem:[#allocation2 + $0x50] sm:$0xff]
    %v194 = vld [vmem:[#allocation2 + $0x60] sm:$0xff]
    %v195 = vld [vmem:[#allocation2 + $0x68] sm:$0xff]
    %v196 = vld [vmem:[#allocation2 + $0x70] sm:$0xff]
    %v197 = vpack.c.bf16 %v188, %v185
    %v198 = vpack.c.bf16 %v189, %v186
    %v199 = vpack.c.bf16 %v190, %v187
    %v200 = vpack.c.bf16 %v194, %v191
    %v201 = vpack.c.bf16 %v195, %v192
    %v202 = vpack.c.bf16 %v196, %v193
    %206 = vrot.lane.b32.xlu0 %v197, 16
    %v207 = vpop.permute.xlu0 %206
    %208 = vrot.lane.b32.xlu0 %v198, 16
    %v209 = vpop.permute.xlu0 %208
    %210 = vrot.lane.b32.xlu0 %v199, 16
    %v211 = vpop.permute.xlu0 %210
    %vm212 = vcmask 130048
    %v213 = vsel %vm212, %v207, %v209
    %v214 = vsel %vm212, %v209, %v211
    %217 = vst [vmem:[#allocation3 + $0x20] sm:$0xff] %v213
    %218 = vst [vmem:[#allocation3 + $0x28] sm:$0xff] %v214
    %222 = vrot.lane.b32.xlu0 %v200, 16
    %v223 = vpop.permute.xlu0 %222
    %224 = vrot.lane.b32.xlu0 %v201, 16
    %v225 = vpop.permute.xlu0 %224
    %226 = vrot.lane.b32.xlu0 %v202, 16
    %v227 = vpop.permute.xlu0 %226
    %v228 = vsel %vm212, %v223, %v225
    %v229 = vsel %vm212, %v225, %v227
    %232 = vst [vmem:[#allocation3 + $0x30] sm:$0xff] %v228
    %233 = vst [vmem:[#allocation3 + $0x38] sm:$0xff] %v229
    %v234 = vld [vmem:[#allocation2] sm:$0xff]
    %v235 = vld [vmem:[#allocation2 + $0x8] sm:$0xff]
    %v236 = vld [vmem:[#allocation2 + $0x10] sm:$0xff]
    %v237 = vld [vmem:[#allocation2 + $0x20] sm:$0xff]
    %v238 = vld [vmem:[#allocation2 + $0x28] sm:$0xff]
    %v239 = vld [vmem:[#allocation2 + $0x30] sm:$0xff]
    %v240 = vld [vmem:[#allocation2 + $0x40] sm:$0xff]
    %v241 = vld [vmem:[#allocation2 + $0x48] sm:$0xff]
    %v242 = vld [vmem:[#allocation2 + $0x50] sm:$0xff]
    %v243 = vld [vmem:[#allocation2 + $0x60] sm:$0xff]
    %v244 = vld [vmem:[#allocation2 + $0x68] sm:$0xff]
    %v245 = vld [vmem:[#allocation2 + $0x70] sm:$0xff]
    %v246 = vadd.s32 %v90, 1
    %v247 = vadd.s32 %v91, 1
    %vm248 = vcmp.ge.s32.totalorder %v246, 0
    %vm249 = vcmp.ge.s32.totalorder %v247, 0
    %vm250 = vcmp.lt.s32.totalorder %v246, 16
    %vm251 = vcmp.lt.s32.totalorder %v247, 16
    %vm252 = vmand %vm248, %vm250
    %vm253 = vmand %vm249, %vm251
    %v254 = vsel %vm252, 1, 0
    %v255 = vsel %vm253, 1, 0
    %vm256 = vcmp.eq.s32.totalorder %v254, 1
    %vm257 = vcmp.eq.s32.totalorder %v255, 1
    %270 = vrot.lane.b32.xlu0 %v234, 15
    %v271 = vpop.permute.xlu0 %270
    %272 = vrot.lane.b32.xlu0 %v235, 15
    %v273 = vpop.permute.xlu0 %272
    %274 = vrot.lane.b32.xlu0 %v236, 15
    %v275 = vpop.permute.xlu0 %274
    %276 = vrot.lane.b32.xlu0 %v237, 15
    %v277 = vpop.permute.xlu0 %276
    %278 = vrot.lane.b32.xlu0 %v238, 15
    %v279 = vpop.permute.xlu0 %278
    %280 = vrot.lane.b32.xlu0 %v239, 15
    %v281 = vpop.permute.xlu0 %280
    %282 = vrot.lane.b32.xlu0 %v240, 15
    %v283 = vpop.permute.xlu0 %282
    %284 = vrot.lane.b32.xlu0 %v241, 15
    %v285 = vpop.permute.xlu0 %284
    %286 = vrot.lane.b32.xlu0 %v242, 15
    %v287 = vpop.permute.xlu0 %286
    %288 = vrot.lane.b32.xlu0 %v243, 15
    %v289 = vpop.permute.xlu0 %288
    %290 = vrot.lane.b32.xlu0 %v244, 15
    %v291 = vpop.permute.xlu0 %290
    %292 = vrot.lane.b32.xlu0 %v245, 15
    %v293 = vpop.permute.xlu0 %292
    %vm294 = vcmask 121856
    %v295 = vsel %vm294, %v271, %v273
    %v296 = vsel %vm294, %v273, %v275
    %v297 = vsel %vm294, %v277, %v279
    %v298 = vsel %vm294, %v279, %v281
    %v299 = vsel %vm294, %v283, %v285
    %v300 = vsel %vm294, %v285, %v287
    %v301 = vsel %vm294, %v289, %v291
    %v302 = vsel %vm294, %v291, %v293
    %v311 = vsel %vm256, %v295, 0.0
    %v312 = vsel %vm257, %v296, 0.0
    %v313 = vsel %vm256, %v297, 0.0
    %v314 = vsel %vm257, %v298, 0.0
    %v315 = vsel %vm256, %v299, 0.0
    %v316 = vsel %vm257, %v300, 0.0
    %v317 = vsel %vm256, %v301, 0.0
    %v318 = vsel %vm257, %v302, 0.0
    %v319 = vpack.c.bf16 %v313, %v311
    %v320 = vpack.c.bf16 %v314, %v312
    %v321 = vpack.c.bf16 %v317, %v315
    %v322 = vpack.c.bf16 %v318, %v316
    %323 = vst [vmem:[#allocation3 + $0x40] sm:$0xff] %v319
    %324 = vst [vmem:[#allocation3 + $0x48] sm:$0xff] %v320
    %325 = vst [vmem:[#allocation3 + $0x50] sm:$0xff] %v321
    %326 = vst [vmem:[#allocation3 + $0x58] sm:$0xff] %v322
    %v327 = vld [vmem:[#allocation2] sm:$0xff]
    %v328 = vld [vmem:[#allocation2 + $0x8] sm:$0xff]
    %v329 = vld [vmem:[#allocation2 + $0x10] sm:$0xff]
    %v330 = vld [vmem:[#allocation2 + $0x20] sm:$0xff]
    %v331 = vld [vmem:[#allocation2 + $0x28] sm:$0xff]
    %v332 = vld [vmem:[#allocation2 + $0x30] sm:$0xff]
    %v333 = vld [vmem:[#allocation2 + $0x40] sm:$0xff]
    %v334 = vld [vmem:[#allocation2 + $0x48] sm:$0xff]
    %v335 = vld [vmem:[#allocation2 + $0x50] sm:$0xff]
    %v336 = vld [vmem:[#allocation2 + $0x60] sm:$0xff]
    %v337 = vld [vmem:[#allocation2 + $0x68] sm:$0xff]
    %v338 = vld [vmem:[#allocation2 + $0x70] sm:$0xff]
    %351 = vrot.lane.b32.xlu0 %v327, 1
    %v352 = vpop.permute.xlu0 %351
    %353 = vrot.lane.b32.xlu0 %v328, 1
    %v354 = vpop.permute.xlu0 %353
    %355 = vrot.lane.b32.xlu0 %v329, 1
    %v356 = vpop.permute.xlu0 %355
    %357 = vrot.lane.b32.xlu0 %v330, 1
    %v358 = vpop.permute.xlu0 %357
    %359 = vrot.lane.b32.xlu0 %v331, 1
    %v360 = vpop.permute.xlu0 %359
    %361 = vrot.lane.b32.xlu0 %v332, 1
    %v362 = vpop.permute.xlu0 %361
    %363 = vrot.lane.b32.xlu0 %v333, 1
    %v364 = vpop.permute.xlu0 %363
    %365 = vrot.lane.b32.xlu0 %v334, 1
    %v366 = vpop.permute.xlu0 %365
    %367 = vrot.lane.b32.xlu0 %v335, 1
    %v368 = vpop.permute.xlu0 %367
    %369 = vrot.lane.b32.xlu0 %v336, 1
    %v370 = vpop.permute.xlu0 %369
    %371 = vrot.lane.b32.xlu0 %v337, 1
    %v372 = vpop.permute.xlu0 %371
    %373 = vrot.lane.b32.xlu0 %v338, 1
    %v374 = vpop.permute.xlu0 %373
    %vm375 = vcmask 7168
    %v376 = vsel %vm375, %v352, %v354
    %v377 = vsel %vm375, %v354, %v356
    %v378 = vsel %vm375, %v358, %v360
    %v379 = vsel %vm375, %v360, %v362
    %v380 = vsel %vm375, %v364, %v366
    %v381 = vsel %vm375, %v366, %v368
    %v382 = vsel %vm375, %v370, %v372
    %v383 = vsel %vm375, %v372, %v374
    %v392 = vsel %vm114, %v376, 0.0
    %v393 = vsel %vm115, %v377, 0.0
    %v394 = vsel %vm114, %v378, 0.0
    %v395 = vsel %vm115, %v379, 0.0
    %v396 = vsel %vm114, %v380, 0.0
    %v397 = vsel %vm115, %v381, 0.0
    %v398 = vsel %vm114, %v382, 0.0
    %v399 = vsel %vm115, %v383, 0.0
    %v400 = vpack.c.bf16 %v394, %v392
    %v401 = vpack.c.bf16 %v395, %v393
    %v402 = vpack.c.bf16 %v398, %v396
    %v403 = vpack.c.bf16 %v399, %v397
    %404 = vst [vmem:[#allocation3 + $0x60] sm:$0xff] %v400
    %405 = vst [vmem:[#allocation3 + $0x68] sm:$0xff] %v401
    %406 = vst [vmem:[#allocation3 + $0x70] sm:$0xff] %v402
    %407 = vst [vmem:[#allocation3 + $0x78] sm:$0xff] %v403
    %v408 = vld [vmem:[#allocation2 + $0x8] sm:$0xff]
    %v409 = vld [vmem:[#allocation2 + $0x10] sm:$0xff]
    %v410 = vld [vmem:[#allocation2 + $0x28] sm:$0xff]
    %v411 = vld [vmem:[#allocation2 + $0x30] sm:$0xff]
    %v412 = vld [vmem:[#allocation2 + $0x48] sm:$0xff]
    %v413 = vld [vmem:[#allocation2 + $0x50] sm:$0xff]
    %v414 = vld [vmem:[#allocation2 + $0x68] sm:$0xff]
    %v415 = vld [vmem:[#allocation2 + $0x70] sm:$0xff]
    %v416 = vpack.c.bf16 %v410, %v408
    %v417 = vpack.c.bf16 %v411, %v409
    %v418 = vpack.c.bf16 %v414, %v412
    %v419 = vpack.c.bf16 %v415, %v413
    %420 = vst [vmem:[#allocation3 + $0x80] sm:$0xff] %v416
    %421 = vst [vmem:[#allocation3 + $0x88] sm:$0xff] %v417
    %422 = vst [vmem:[#allocation3 + $0x90] sm:$0xff] %v418
    %423 = vst [vmem:[#allocation3 + $0x98] sm:$0xff] %v419
    %v424 = vld [vmem:[#allocation2 + $0x8] sm:$0xff]
    %v425 = vld [vmem:[#allocation2 + $0x10] sm:$0xff]
    %v426 = vld [vmem:[#allocation2 + $0x18] sm:$0xff]
    %v427 = vld [vmem:[#allocation2 + $0x28] sm:$0xff]
    %v428 = vld [vmem:[#allocation2 + $0x30] sm:$0xff]
    %v429 = vld [vmem:[#allocation2 + $0x38] sm:$0xff]
    %v430 = vld [vmem:[#allocation2 + $0x48] sm:$0xff]
    %v431 = vld [vmem:[#allocation2 + $0x50] sm:$0xff]
    %v432 = vld [vmem:[#allocation2 + $0x58] sm:$0xff]
    %v433 = vld [vmem:[#allocation2 + $0x68] sm:$0xff]
    %v434 = vld [vmem:[#allocation2 + $0x70] sm:$0xff]
    %v435 = vld [vmem:[#allocation2 + $0x78] sm:$0xff]
    %448 = vrot.lane.b32.xlu0 %v424, 127
    %v449 = vpop.permute.xlu0 %448
    %450 = vrot.lane.b32.xlu0 %v425, 127
    %v451 = vpop.permute.xlu0 %450
    %452 = vrot.lane.b32.xlu0 %v426, 127
    %v453 = vpop.permute.xlu0 %452
    %454 = vrot.lane.b32.xlu0 %v427, 127
    %v455 = vpop.permute.xlu0 %454
    %456 = vrot.lane.b32.xlu0 %v428, 127
    %v457 = vpop.permute.xlu0 %456
    %458 = vrot.lane.b32.xlu0 %v429, 127
    %v459 = vpop.permute.xlu0 %458
    %460 = vrot.lane.b32.xlu0 %v430, 127
    %v461 = vpop.permute.xlu0 %460
    %462 = vrot.lane.b32.xlu0 %v431, 127
    %v463 = vpop.permute.xlu0 %462
    %464 = vrot.lane.b32.xlu0 %v432, 127
    %v465 = vpop.permute.xlu0 %464
    %466 = vrot.lane.b32.xlu0 %v433, 127
    %v467 = vpop.permute.xlu0 %466
    %468 = vrot.lane.b32.xlu0 %v434, 127
    %v469 = vpop.permute.xlu0 %468
    %470 = vrot.lane.b32.xlu0 %v435, 127
    %v471 = vpop.permute.xlu0 %470
    %vm472 = vcmask 1039360
    %v473 = vsel %vm472, %v449, %v451
    %v474 = vsel %vm472, %v451, %v453
    %v475 = vsel %vm472, %v455, %v457
    %v476 = vsel %vm472, %v457, %v459
    %v477 = vsel %vm472, %v461, %v463
    %v478 = vsel %vm472, %v463, %v465
    %v479 = vsel %vm472, %v467, %v469
    %v480 = vsel %vm472, %v469, %v471
    %v489 = vsel %vm256, %v473, 0.0
    %v490 = vsel %vm257, %v474, 0.0
    %v491 = vsel %vm256, %v475, 0.0
    %v492 = vsel %vm257, %v476, 0.0
    %v493 = vsel %vm256, %v477, 0.0
    %v494 = vsel %vm257, %v478, 0.0
    %v495 = vsel %vm256, %v479, 0.0
    %v496 = vsel %vm257, %v480, 0.0
    %v497 = vpack.c.bf16 %v491, %v489
    %v498 = vpack.c.bf16 %v492, %v490
    %v499 = vpack.c.bf16 %v495, %v493
    %v500 = vpack.c.bf16 %v496, %v494
    %501 = vst [vmem:[#allocation3 + $0xa0] sm:$0xff] %v497
    %502 = vst [vmem:[#allocation3 + $0xa8] sm:$0xff] %v498
    %503 = vst [vmem:[#allocation3 + $0xb0] sm:$0xff] %v499
    %504 = vst [vmem:[#allocation3 + $0xb8] sm:$0xff] %v500
    %v505 = vld [vmem:[#allocation2 + $0x8] sm:$0xff]
    %v506 = vld [vmem:[#allocation2 + $0x10] sm:$0xff]
    %v507 = vld [vmem:[#allocation2 + $0x18] sm:$0xff]
    %v508 = vld [vmem:[#allocation2 + $0x28] sm:$0xff]
    %v509 = vld [vmem:[#allocation2 + $0x30] sm:$0xff]
    %v510 = vld [vmem:[#allocation2 + $0x38] sm:$0xff]
    %v511 = vld [vmem:[#allocation2 + $0x48] sm:$0xff]
    %v512 = vld [vmem:[#allocation2 + $0x50] sm:$0xff]
    %v513 = vld [vmem:[#allocation2 + $0x58] sm:$0xff]
    %v514 = vld [vmem:[#allocation2 + $0x68] sm:$0xff]
    %v515 = vld [vmem:[#allocation2 + $0x70] sm:$0xff]
    %v516 = vld [vmem:[#allocation2 + $0x78] sm:$0xff]
    %529 = vrot.lane.b32.xlu0 %v505, 113
    %v530 = vpop.permute.xlu0 %529
    %531 = vrot.lane.b32.xlu0 %v506, 113
    %v532 = vpop.permute.xlu0 %531
    %533 = vrot.lane.b32.xlu0 %v507, 113
    %v534 = vpop.permute.xlu0 %533
    %535 = vrot.lane.b32.xlu0 %v508, 113
    %v536 = vpop.permute.xlu0 %535
    %537 = vrot.lane.b32.xlu0 %v509, 113
    %v538 = vpop.permute.xlu0 %537
    %539 = vrot.lane.b32.xlu0 %v510, 113
    %v540 = vpop.permute.xlu0 %539
    %541 = vrot.lane.b32.xlu0 %v511, 113
    %v542 = vpop.permute.xlu0 %541
    %543 = vrot.lane.b32.xlu0 %v512, 113
    %v544 = vpop.permute.xlu0 %543
    %545 = vrot.lane.b32.xlu0 %v513, 113
    %v546 = vpop.permute.xlu0 %545
    %547 = vrot.lane.b32.xlu0 %v514, 113
    %v548 = vpop.permute.xlu0 %547
    %549 = vrot.lane.b32.xlu0 %v515, 113
    %v550 = vpop.permute.xlu0 %549
    %551 = vrot.lane.b32.xlu0 %v516, 113
    %v552 = vpop.permute.xlu0 %551
    %vm553 = vcmask 924672
    %v554 = vsel %vm553, %v530, %v532
    %v555 = vsel %vm553, %v532, %v534
    %v556 = vsel %vm553, %v536, %v538
    %v557 = vsel %vm553, %v538, %v540
    %v558 = vsel %vm553, %v542, %v544
    %v559 = vsel %vm553, %v544, %v546
    %v560 = vsel %vm553, %v548, %v550
    %v561 = vsel %vm553, %v550, %v552
    %v570 = vsel %vm114, %v554, 0.0
    %v571 = vsel %vm115, %v555, 0.0
    %v572 = vsel %vm114, %v556, 0.0
    %v573 = vsel %vm115, %v557, 0.0
    %v574 = vsel %vm114, %v558, 0.0
    %v575 = vsel %vm115, %v559, 0.0
    %v576 = vsel %vm114, %v560, 0.0
    %v577 = vsel %vm115, %v561, 0.0
    %v578 = vpack.c.bf16 %v572, %v570
    %v579 = vpack.c.bf16 %v573, %v571
    %v580 = vpack.c.bf16 %v576, %v574
    %v581 = vpack.c.bf16 %v577, %v575
    %582 = vst [vmem:[#allocation3 + $0xc0] sm:$0xff] %v578
    %583 = vst [vmem:[#allocation3 + $0xc8] sm:$0xff] %v579
    %584 = vst [vmem:[#allocation3 + $0xd0] sm:$0xff] %v580
    %585 = vst [vmem:[#allocation3 + $0xd8] sm:$0xff] %v581
    %v586 = vld [vmem:[#allocation2 + $0x8] sm:$0xff]
    %v587 = vld [vmem:[#allocation2 + $0x10] sm:$0xff]
    %v588 = vld [vmem:[#allocation2 + $0x18] sm:$0xff]
    %v589 = vld [vmem:[#allocation2 + $0x28] sm:$0xff]
    %v590 = vld [vmem:[#allocation2 + $0x30] sm:$0xff]
    %v591 = vld [vmem:[#allocation2 + $0x38] sm:$0xff]
    %v592 = vld [vmem:[#allocation2 + $0x48] sm:$0xff]
    %v593 = vld [vmem:[#allocation2 + $0x50] sm:$0xff]
    %v594 = vld [vmem:[#allocation2 + $0x58] sm:$0xff]
    %v595 = vld [vmem:[#allocation2 + $0x68] sm:$0xff]
    %v596 = vld [vmem:[#allocation2 + $0x70] sm:$0xff]
    %v597 = vld [vmem:[#allocation2 + $0x78] sm:$0xff]
    %v598 = vpack.c.bf16 %v589, %v586
    %v599 = vpack.c.bf16 %v590, %v587
    %v600 = vpack.c.bf16 %v591, %v588
    %v601 = vpack.c.bf16 %v595, %v592
    %v602 = vpack.c.bf16 %v596, %v593
    %v603 = vpack.c.bf16 %v597, %v594
    %607 = vrot.lane.b32.xlu0 %v598, 112
    %v608 = vpop.permute.xlu0 %607
    %609 = vrot.lane.b32.xlu0 %v599, 112
    %v610 = vpop.permute.xlu0 %609
    %611 = vrot.lane.b32.xlu0 %v600, 112
    %v612 = vpop.permute.xlu0 %611
    %vm613 = vcmask 916480
    %v614 = vsel %vm613, %v608, %v610
    %v615 = vsel %vm613, %v610, %v612
    %618 = vst [vmem:[#allocation3 + $0xe0] sm:$0xff] %v614
    %619 = vst [vmem:[#allocation3 + $0xe8] sm:$0xff] %v615
    %623 = vrot.lane.b32.xlu0 %v601, 112
    %v624 = vpop.permute.xlu0 %623
    %625 = vrot.lane.b32.xlu0 %v602, 112
    %v626 = vpop.permute.xlu0 %625
    %627 = vrot.lane.b32.xlu0 %v603, 112
    %v628 = vpop.permute.xlu0 %627
    %v629 = vsel %vm613, %v624, %v626
    %v630 = vsel %vm613, %v626, %v628
    %633 = vst [vmem:[#allocation3 + $0xf0] sm:$0xff] %v629
    %634 = vst [vmem:[#allocation3 + $0xf8] sm:$0xff] %v630
    %v635 = vld [vmem:[#allocation2 + $0x8] sm:$0xff]
    %v636 = vld [vmem:[#allocation2 + $0x10] sm:$0xff]
    %v637 = vld [vmem:[#allocation2 + $0x18] sm:$0xff]
    %v638 = vld [vmem:[#allocation2 + $0x28] sm:$0xff]
    %v639 = vld [vmem:[#allocation2 + $0x30] sm:$0xff]
    %v640 = vld [vmem:[#allocation2 + $0x38] sm:$0xff]
    %v641 = vld [vmem:[#allocation2 + $0x48] sm:$0xff]
    %v642 = vld [vmem:[#allocation2 + $0x50] sm:$0xff]
    %v643 = vld [vmem:[#allocation2 + $0x58] sm:$0xff]
    %v644 = vld [vmem:[#allocation2 + $0x68] sm:$0xff]
    %v645 = vld [vmem:[#allocation2 + $0x70] sm:$0xff]
    %v646 = vld [vmem:[#allocation2 + $0x78] sm:$0xff]
    %659 = vrot.lane.b32.xlu0 %v635, 111
    %v660 = vpop.permute.xlu0 %659
    %661 = vrot.lane.b32.xlu0 %v636, 111
    %v662 = vpop.permute.xlu0 %661
    %663 = vrot.lane.b32.xlu0 %v637, 111
    %v664 = vpop.permute.xlu0 %663
    %665 = vrot.lane.b32.xlu0 %v638, 111
    %v666 = vpop.permute.xlu0 %665
    %667 = vrot.lane.b32.xlu0 %v639, 111
    %v668 = vpop.permute.xlu0 %667
    %669 = vrot.lane.b32.xlu0 %v640, 111
    %v670 = vpop.permute.xlu0 %669
    %671 = vrot.lane.b32.xlu0 %v641, 111
    %v672 = vpop.permute.xlu0 %671
    %673 = vrot.lane.b32.xlu0 %v642, 111
    %v674 = vpop.permute.xlu0 %673
    %675 = vrot.lane.b32.xlu0 %v643, 111
    %v676 = vpop.permute.xlu0 %675
    %677 = vrot.lane.b32.xlu0 %v644, 111
    %v678 = vpop.permute.xlu0 %677
    %679 = vrot.lane.b32.xlu0 %v645, 111
    %v680 = vpop.permute.xlu0 %679
    %681 = vrot.lane.b32.xlu0 %v646, 111
    %v682 = vpop.permute.xlu0 %681
    %vm683 = vcmask 908288
    %v684 = vsel %vm683, %v660, %v662
    %v685 = vsel %vm683, %v662, %v664
    %v686 = vsel %vm683, %v666, %v668
    %v687 = vsel %vm683, %v668, %v670
    %v688 = vsel %vm683, %v672, %v674
    %v689 = vsel %vm683, %v674, %v676
    %v690 = vsel %vm683, %v678, %v680
    %v691 = vsel %vm683, %v680, %v682
    %v700 = vsel %vm256, %v684, 0.0
    %v701 = vsel %vm257, %v685, 0.0
    %v702 = vsel %vm256, %v686, 0.0
    %v703 = vsel %vm257, %v687, 0.0
    %v704 = vsel %vm256, %v688, 0.0
    %v705 = vsel %vm257, %v689, 0.0
    %v706 = vsel %vm256, %v690, 0.0
    %v707 = vsel %vm257, %v691, 0.0
    %v708 = vpack.c.bf16 %v702, %v700
    %v709 = vpack.c.bf16 %v703, %v701
    %v710 = vpack.c.bf16 %v706, %v704
    %v711 = vpack.c.bf16 %v707, %v705
    %712 = vst [vmem:[#allocation3 + $0x100] sm:$0xff] %v708
    %713 = vst [vmem:[#allocation3 + $0x108] sm:$0xff] %v709
    %714 = vst [vmem:[#allocation3 + $0x110] sm:$0xff] %v710
    %715 = vst [vmem:[#allocation3 + $0x118] sm:$0xff] %v711
    %v716 = vld [vmem:[%s1] sm:$0xff]
    %v717 = vld [vmem:[#allocation3] sm:$0xff]
    %v718 = vld [vmem:[#allocation3 + $0x8] sm:$0xff]
    %v719 = vld [vmem:[#allocation3 + $0x10] sm:$0xff]
    %v720 = vld [vmem:[#allocation3 + $0x18] sm:$0xff]
    %v721 = vld [vmem:[#allocation3 + $0x20] sm:$0xff]
    %v722 = vld [vmem:[#allocation3 + $0x28] sm:$0xff]
    %v723 = vld [vmem:[#allocation3 + $0x30] sm:$0xff]
    %v724 = vld [vmem:[#allocation3 + $0x38] sm:$0xff]
    %v725 = vld [vmem:[#allocation3 + $0x40] sm:$0xff]
    %v726 = vld [vmem:[#allocation3 + $0x48] sm:$0xff]
    %v727 = vld [vmem:[#allocation3 + $0x50] sm:$0xff]
    %v728 = vld [vmem:[#allocation3 + $0x58] sm:$0xff]
    %v729 = vld [vmem:[#allocation3 + $0x60] sm:$0xff]
    %v730 = vld [vmem:[#allocation3 + $0x68] sm:$0xff]
    %v731 = vld [vmem:[#allocation3 + $0x70] sm:$0xff]
    %v732 = vld [vmem:[#allocation3 + $0x78] sm:$0xff]
    %v733 = vld [vmem:[#allocation3 + $0x80] sm:$0xff]
    %v734 = vld [vmem:[#allocation3 + $0x88] sm:$0xff]
    %v735 = vld [vmem:[#allocation3 + $0x90] sm:$0xff]
    %v736 = vld [vmem:[#allocation3 + $0x98] sm:$0xff]
    %v737 = vld [vmem:[#allocation3 + $0xa0] sm:$0xff]
    %v738 = vld [vmem:[#allocation3 + $0xa8] sm:$0xff]
    %v739 = vld [vmem:[#allocation3 + $0xb0] sm:$0xff]
    %v740 = vld [vmem:[#allocation3 + $0xb8] sm:$0xff]
    %v741 = vld [vmem:[#allocation3 + $0xc0] sm:$0xff]
    %v742 = vld [vmem:[#allocation3 + $0xc8] sm:$0xff]
    %v743 = vld [vmem:[#allocation3 + $0xd0] sm:$0xff]
    %v744 = vld [vmem:[#allocation3 + $0xd8] sm:$0xff]
    %v745 = vld [vmem:[#allocation3 + $0xe0] sm:$0xff]
    %v746 = vld [vmem:[#allocation3 + $0xe8] sm:$0xff]
    %v747 = vld [vmem:[#allocation3 + $0xf0] sm:$0xff]
    %v748 = vld [vmem:[#allocation3 + $0xf8] sm:$0xff]
    %v749 = vld [vmem:[#allocation3 + $0x100] sm:$0xff]
    %v750 = vld [vmem:[#allocation3 + $0x108] sm:$0xff]
    %v751 = vld [vmem:[#allocation3 + $0x110] sm:$0xff]
    %v752 = vld [vmem:[#allocation3 + $0x118] sm:$0xff]
    %v754 = vunpack.c.l.b16 %v716
    %v755 = vunpack.c.h.b16 %v716
    %v756 = vpack.c.b16 %v754, %v754
    %v757 = vpack.c.b16 %v755, %v755
    %vm759 = vcmask 130048
    %v761 = vsel %vm759, %v757, 0
    %763 = vmatprep.subr.bf16.mxu0 %v718
    %764 = vmatpush1.bf16.msra.mxu0 %v717
    %765 = vmatprep.subr.bf16.mxu0 %v722
    %766 = vmatpush1.bf16.msra.mxu0 %v721
    %767 = vmatprep.subr.bf16.mxu0 %v726
    %768 = vmatpush1.bf16.msra.mxu0 %v725
    %769 = vmatprep.subr.bf16.mxu0 %v730
    %770 = vmatpush1.bf16.msra.mxu0 %v729
    %771 = vmatprep.subr.bf16.mxu0 %v734
    %772 = vmatpush1.bf16.msra.mxu0 %v733
    %773 = vmatprep.subr.bf16.mxu0 %v738
    %774 = vmatpush1.bf16.msra.mxu0 %v737
    %775 = vmatprep.subr.bf16.mxu0 %v742
    %776 = vmatpush1.bf16.msra.mxu0 %v741
    %777 = vmatprep.subr.bf16.mxu0 %v746
    %778 = vmatpush1.bf16.msra.mxu0 %v745
    %779 = vmatprep.subr.bf16.mxu0 %v750
    %780 = vmatpush1.bf16.msra.mxu0 %v749
    %781 = vmatprep.subr.bf16.mxu0 0
    %782 = vmatpush1.bf16.msra.mxu0 0
    %783 = vmatprep.subr.bf16.mxu0 0
    %784 = vmatpush1.bf16.msra.mxu0 0
    %785 = vmatprep.subr.bf16.mxu0 0
    %786 = vmatpush1.bf16.msra.mxu0 0
    %787 = vmatprep.subr.bf16.mxu0 0
    %788 = vmatpush1.bf16.msra.mxu0 0
    %789 = vmatprep.subr.bf16.mxu0 0
    %790 = vmatpush1.bf16.msra.mxu0 0
    %791 = vmatprep.subr.bf16.mxu0 0
    %792 = vmatpush1.bf16.msra.mxu0 0
    %793 = vmatprep.subr.bf16.mxu0 0
    %794 = vmatpush1.bf16.msra.mxu0 0
    %795 = vmatprep.mubr.bf16.mxu0 %v761
    %796 = vmatmul.mubr.bf16.gmra.mrb[0].mxu0 %v756
    %v797 = vpop.f32.mrb[0].mxu0
    %v798 = vadd.f32 0.0, %v797
    %v799 = vpop.f32.mrb[0].mxu0
    %v800 = vadd.f32 0.0, %v799
    %v801 = vpop.f32.mrb[0].mxu0
    %v802 = vpop.f32.mrb[0].mxu0
    %803 = vdwg.mxu0
    %804 = vmatprep.subr.bf16.mxu0 %v720
    %805 = vmatpush1.bf16.msra.mxu0 %v719
    %806 = vmatprep.subr.bf16.mxu0 %v724
    %807 = vmatpush1.bf16.msra.mxu0 %v723
    %808 = vmatprep.subr.bf16.mxu0 %v728
    %809 = vmatpush1.bf16.msra.mxu0 %v727
    %810 = vmatprep.subr.bf16.mxu0 %v732
    %811 = vmatpush1.bf16.msra.mxu0 %v731
    %812 = vmatprep.subr.bf16.mxu0 %v736
    %813 = vmatpush1.bf16.msra.mxu0 %v735
    %814 = vmatprep.subr.bf16.mxu0 %v740
    %815 = vmatpush1.bf16.msra.mxu0 %v739
    %816 = vmatprep.subr.bf16.mxu0 %v744
    %817 = vmatpush1.bf16.msra.mxu0 %v743
    %818 = vmatprep.subr.bf16.mxu0 %v748
    %819 = vmatpush1.bf16.msra.mxu0 %v747
    %820 = vmatprep.subr.bf16.mxu0 %v752
    %821 = vmatpush1.bf16.msra.mxu0 %v751
    %822 = vmatprep.subr.bf16.mxu0 0
    %823 = vmatpush1.bf16.msra.mxu0 0
    %824 = vmatprep.subr.bf16.mxu0 0
    %825 = vmatpush1.bf16.msra.mxu0 0
    %826 = vmatprep.subr.bf16.mxu0 0
    %827 = vmatpush1.bf16.msra.mxu0 0
    %828 = vmatprep.subr.bf16.mxu0 0
    %829 = vmatpush1.bf16.msra.mxu0 0
    %830 = vmatprep.subr.bf16.mxu0 0
    %831 = vmatpush1.bf16.msra.mxu0 0
    %832 = vmatprep.subr.bf16.mxu0 0
    %833 = vmatpush1.bf16.msra.mxu0 0
    %834 = vmatprep.subr.bf16.mxu0 0
    %835 = vmatpush1.bf16.msra.mxu0 0
    %836 = vmatprep.mubr.bf16.mxu0 %v761
    %837 = vmatmul.mubr.bf16.gmra.mrb[0].mxu0 %v756
    %v838 = vpop.f32.mrb[0].mxu0
    %v839 = vadd.f32 0.0, %v838
    %v840 = vpop.f32.mrb[0].mxu0
    %v841 = vadd.f32 0.0, %v840
    %v842 = vpop.f32.mrb[0].mxu0
    %v843 = vpop.f32.mrb[0].mxu0
    %844 = vdwg.mxu0
    %v845 = vadd.f32 %v798, %v800
    %v846 = vadd.f32 %v845, %v839
    %v847 = vadd.f32 %v846, %v841
    %848 = vadd.xlane.f32.xlu0 %v847
    %v849 = vpop.xlane.xlu0 %848
    %v850 = vmul.f32 %v798, %v798
    %v851 = vmul.f32 %v800, %v800
    %v852 = vmul.f32 %v839, %v839
    %v853 = vmul.f32 %v841, %v841
    %v854 = vadd.f32 %v850, %v851
    %v855 = vadd.f32 %v854, %v852
    %v856 = vadd.f32 %v855, %v853
    %857 = vadd.xlane.f32.xlu0 %v856
    %v858 = vpop.xlane.xlu0 %857
    %v859 = vsel %vm375, %v849, %v858
    %vm860 = vcmask 15360
    %861 = vst.msk [vmem:[%s5] sm:$0xff] %vm860, %v859
    %862 = vst [vmem:[#allocation7] sm:$0xff] %v798
    %863 = vst [vmem:[#allocation7 + $0x8] sm:$0xff] %v800
    %s864 = scalar_lea.vmem [#allocation7], 16
    %865 = vst [vmem:[%s864] sm:$0xff] %v839
    %866 = vst [vmem:[%s864 + $0x8] sm:$0xff] %v841
    // Predicated region
    $region22: #{tpu_custom_call.1} parent=1 // pred_check
      _
    $region23: #{tpu_custom_call.1} parent=1 // pred_check_branch
      %868 = sbr.rel (0) target = $region25
    $region24: #{tpu_custom_call.1} parent=1 // pred_region
      %s870 = ssub.s32 512, 512
      %871 = vsyncadd [#allocation6], %s870
      %s872 = sshll.u32 [#allocation7], 4
      %s873 = int_to_ptr.vmem [resolvable:$true] %s872
      %878 = dma.vmem_to_hbm [thread:$0]  %s873, 512, %s4, [#allocation6], 256, 256, 16
    $region25: #{tpu_custom_call.1} parent=1 // pred_fallthru
      _
    // Predicated region
    $region26: #{tpu_custom_call.1} parent=1 // pred_check
      _
    $region27: #{tpu_custom_call.1} parent=1 // pred_check_branch
      %880 = sbr.rel (0) target = $region29
    $region28: #{tpu_custom_call.1} parent=1 // pred_region
      _
    $region29: #{tpu_custom_call.1} parent=1 // pred_fallthru
      _
    // Predicated region
    $region30: #{tpu_custom_call.1} parent=1 // pred_check
      _
    $region31: #{tpu_custom_call.1} parent=1 // pred_check_branch
      %882 = sbr.rel (0) target = $region33
    $region32: #{tpu_custom_call.1} parent=1 // pred_region
      %883 = dma.done [#allocation6], 512
    $region33: #{tpu_custom_call.1} parent=1 // pred_fallthru
      _
    // Predicated region
    $region34: #{tpu_custom_call.1} parent=1 // pred_check
      _
    $region35: #{tpu_custom_call.1} parent=1 // pred_check_branch
      %885 = sbr.rel (0) target = $region37
    $region36: #{tpu_custom_call.1} parent=1 // pred_region
      _
    $region37: #{tpu_custom_call.1} parent=1 // pred_fallthru
      _
    %886 = vsyncpa [#allocation5], 1
    %887 = vsyncpa [#allocation6], 1

</llo_original>
